<compile_context>
chip_gen: v5e
topology: v5e:2x2
jax: 0.10.0
libtpu: 0.0.40
codegen_flags: <defaults>
</compile_context>

<pallas_src>
import functools

import jax
import jax.numpy as jnp
from jax.experimental import pallas as pl
from jax.experimental.pallas import tpu as pltpu


def _moe_expert_kernel(eids_ref, flags_ref, x_ref, wgu_ref, wd_ref, rw_ref,
                       o_ref, acc_ref, *, tile_i):
    """One grid step = (token tile, active-expert slot, I tile).

    eids_ref : (G,)        SMEM, expert id per slot (used only by index_maps)
    flags_ref: (G,)        SMEM, 1 if slot is a real active expert, 0 if padding
    x_ref    : (TT, H)     token tile (resident across the reduction axes)
    wgu_ref  : (H, 2*TI)   fused [gate | up] weight tile of expert eids[g] (contiguous)
    wd_ref   : (TI, H)     down_proj weight tile of expert eids[g] (contiguous)
    rw_ref   : (TT, 1)     routing weight column for this slot / token tile (f32)
    o_ref    : (TT, H)     output tile (written on the last reduction step)
    acc_ref  : (TT, H)     f32 VMEM accumulator
    """
    g = pl.program_id(1)
    ti = pl.program_id(2)

    @pl.when(jnp.logical_and(g == 0, ti == 0))
    def _init():
        acc_ref[...] = jnp.zeros_like(acc_ref)

    @pl.when(flags_ref[g] == 1)
    def _compute():
        x = x_ref[...]                                                     # (TT, H) bf16
        gu = jnp.dot(x, wgu_ref[...], preferred_element_type=jnp.float32)  # (TT, 2*TI)
        gate = gu[:, :tile_i]
        up = gu[:, tile_i:]
        act = (gate * jax.nn.sigmoid(gate)) * up                           # SiLU(g)*u
        act = act * rw_ref[...]                                            # fold routing weight
        acc_ref[...] += jnp.dot(act.astype(x.dtype), wd_ref[...],
                                preferred_element_type=jnp.float32)        # (TT, H)

    @pl.when(jnp.logical_and(g == pl.num_programs(1) - 1,
                             ti == pl.num_programs(2) - 1))
    def _finalize():
        o_ref[...] = acc_ref[...].astype(o_ref.dtype)


def _vmem_limit_bytes():
    """Generation-aware VMEM budget (~100 MiB on 128 MiB parts, ~51 MiB on 64 MiB parts)."""
    cap = 64 * 1024 * 1024
    try:
        info = pltpu.get_tpu_info()
        cap = int(getattr(info, "vmem_capacity_bytes", cap)) or cap
    except Exception:
        pass
    return min(int(cap * 0.8), 100 * 1024 * 1024)


def _pick_tile_i(I, H, itemsize, vmem_limit):
    """Largest I-tile (multiple of 128, dividing I) whose double-buffered weights fit."""
    budget = int(vmem_limit * 0.4)
    # per step: fused gate/up (H, 2*TI) + down (TI, H) = 3*H*TI elems, x2 pipeline buffers
    cap = max(128, budget // (6 * H * itemsize))
    if I <= cap:
        return I
    ti = (cap // 128) * 128
    while ti >= 128:
        if I % ti == 0:
            return ti
        ti -= 128
    return I


def sparse_moe_forward(x, gating_output, w_gate, w_up, w_down, *, topk,
                       renormalize=True, tile_i=None, tile_t=None):
    """Fused sparse-MoE forward.

    x             : [T, H]
    gating_output : [T, E]
    w_gate, w_up  : [E, I, H]   (nn.Linear convention, y = x @ W.T)
    w_down        : [E, H, I]
    returns       : [T, H] (dtype of x)
    """
    T, H = x.shape
    E, I, _ = w_gate.shape

    vmem_limit = _vmem_limit_bytes()
    itemsize = jnp.dtype(w_gate.dtype).itemsize
    TI = _pick_tile_i(I, H, itemsize, vmem_limit) if tile_i is None else tile_i
    TT = T if tile_t is None else tile_t
    assert I % TI == 0 and T % TT == 0
    NUM_TI = I // TI

    # ---- one-time weight layout plumbing (would be done at weight-load time) ----
    # gate/up fused + retiled so each (expert, I-tile) block is contiguous in HBM.
    wg_tiles = jnp.swapaxes(w_gate.reshape(E, NUM_TI, TI, H), 2, 3)   # [E, NUM_TI, H, TI]
    wu_tiles = jnp.swapaxes(w_up.reshape(E, NUM_TI, TI, H), 2, 3)     # [E, NUM_TI, H, TI]
    wgu = jnp.concatenate([wg_tiles, wu_tiles], axis=-1)              # [E, NUM_TI, H, 2*TI]
    wd_tiles = jnp.swapaxes(w_down, 1, 2).reshape(E, NUM_TI, TI, H)   # [E, NUM_TI, TI, H]

    # ---- routing (glue, plain JAX) ----
    probs = jax.nn.softmax(gating_output.astype(jnp.float32), axis=-1)        # [T, E]
    vals, idx = jax.lax.top_k(probs, topk)                                    # [T, K]
    if renormalize:
        vals = vals / jnp.sum(vals, axis=-1, keepdims=True)

    # ---- compact to active experts (static grid bound G) ----
    G = min(E, T * topk)
    hit = jnp.zeros((E,), jnp.bool_).at[idx.reshape(-1)].set(True)            # [E]
    order = jnp.argsort((~hit).astype(jnp.int32))                             # active ids first
    num_active = jnp.sum(hit.astype(jnp.int32))
    slot = jnp.arange(G, dtype=jnp.int32)
    is_active = (slot < num_active).astype(jnp.int32)                         # [G]
    last_active = order[jnp.maximum(num_active - 1, 0)]
    expert_ids = jnp.where(slot < num_active, order[:G],
                           last_active).astype(jnp.int32)                     # [G]

    # Per-slot routing weights [G, T, 1] built straight from (vals, idx); padded slots
    # repeat the last active expert id, so they must be zeroed to avoid double counting.
    match = idx[None, :, :] == expert_ids[:, None, None]                      # [G, T, K]
    rw_slots = jnp.sum(jnp.where(match, vals[None, :, :], 0.0), axis=-1)      # [G, T]
    rw_slots = jnp.where(is_active[:, None] == 1, rw_slots, 0.0)[..., None]   # [G, T, 1]

    grid = (T // TT, G, NUM_TI)

    # Weight index maps: for inactive (padded) slots clamp the I-tile index to the last
    # tile so the block index equals the immediately preceding grid step's -> the weight
    # DMA is skipped entirely for padded slots.
    def _wgu_map(t, g, ti, eids, flags):
        flag = flags[g]
        ti_eff = ti * flag + (NUM_TI - 1) * (1 - flag)
        return (eids[g], ti_eff, 0, 0)

    def _wd_map(t, g, ti, eids, flags):
        flag = flags[g]
        ti_eff = ti * flag + (NUM_TI - 1) * (1 - flag)
        return (eids[g], ti_eff, 0, 0)

    grid_spec = pltpu.PrefetchScalarGridSpec(
        num_scalar_prefetch=2,
        grid=grid,
        in_specs=[
            # x: resident token tile
            pl.BlockSpec((TT, H), lambda t, g, ti, eids, flags: (t, 0)),
            # fused gate|up weight tile of the active expert (contiguous block)
            pl.BlockSpec((pl.Squeezed(), pl.Squeezed(), H, 2 * TI), _wgu_map),
            # down weight tile (contiguous block)
            pl.BlockSpec((pl.Squeezed(), pl.Squeezed(), TI, H), _wd_map),
            # routing weight column for this slot / token tile
            pl.BlockSpec((pl.Squeezed(), TT, 1),
                         lambda t, g, ti, eids, flags: (g, t, 0)),
        ],
        out_specs=pl.BlockSpec((TT, H), lambda t, g, ti, eids, flags: (t, 0)),
        scratch_shapes=[pltpu.VMEM((TT, H), jnp.float32)],
    )

    # Megacore-shard the token axis only in the prefill regime (several large token
    # tiles); in decode, sharding it would make both cores stream the same weights.
    token_parallel = (T // TT) > 1 and TT >= 128
    dims = ("parallel" if token_parallel else "arbitrary", "arbitrary", "arbitrary")

    kernel = functools.partial(_moe_expert_kernel, tile_i=TI)

    return pl.pallas_call(
        kernel,
        out_shape=jax.ShapeDtypeStruct((T, H), x.dtype),
        grid_spec=grid_spec,
        compiler_params=pltpu.CompilerParams(
            dimension_semantics=dims,
            vmem_limit_bytes=vmem_limit,
        ),
    )(expert_ids, is_active, x, wgu, wd_tiles, rw_slots)


def _reference(x, gating_output, w_gate, w_up, w_down, *, topk, renormalize=True):
    """Pure-JAX f32 reference (dense formulation, identical semantics)."""
    T, H = x.shape
    E = w_gate.shape[0]
    probs = jax.nn.softmax(gating_output.astype(jnp.float32), axis=-1)
    vals, idx = jax.lax.top_k(probs, topk)
    if renormalize:
        vals = vals / jnp.sum(vals, axis=-1, keepdims=True)
    rw = jnp.zeros((T, E), jnp.float32).at[jnp.arange(T)[:, None], idx].set(vals)
    xf = x.astype(jnp.float32)
    g = jnp.einsum("th,eih->tei", xf, w_gate.astype(jnp.float32))
    u = jnp.einsum("th,eih->tei", xf, w_up.astype(jnp.float32))
    act = (g * jax.nn.sigmoid(g)) * u
    y = jnp.einsum("tei,ehi->teh", act, w_down.astype(jnp.float32))
    return jnp.einsum("te,teh->th", rw, y)


if __name__ == "__main__":
    # Small shapes consistent with the module's forward:
    #   x: [num_tokens, hidden], gating_output: [num_tokens, n_experts]
    # Chosen so H / I / I-tile satisfy the (8, 128) tiling rule, the active-expert
    # compaction path is exercised (G = min(E, T*topk) = 16 < E = 32), and NUM_TI = 2
    # exercises the padded-slot I-tile clamping.
    T, H, I, E, TOPK = 8, 128, 256, 32, 2
    TILE_I = 128

    key = jax.random.PRNGKey(0)
    k_x, k_g, k_wg, k_wu, k_wd = jax.random.split(key, 5)

    x = jax.random.normal(k_x, (T, H), dtype=jnp.float32).astype(jnp.bfloat16)
    gating_output = jax.random.normal(k_g, (T, E), dtype=jnp.float32)

    # Deterministic synthetic parameters (bf16, as deployed).
    w_gate = (jax.random.normal(k_wg, (E, I, H), jnp.float32) * 0.05).astype(jnp.bfloat16)
    w_up = (jax.random.normal(k_wu, (E, I, H), jnp.float32) * 0.05).astype(jnp.bfloat16)
    w_down = (jax.random.normal(k_wd, (E, H, I), jnp.float32) * 0.05).astype(jnp.bfloat16)

    out = sparse_moe_forward(
        x, gating_output, w_gate, w_up, w_down,
        topk=TOPK, renormalize=True, tile_i=TILE_I, tile_t=T,
    )
    out = jax.block_until_ready(out)

    ref = _reference(
        x, gating_output, w_gate, w_up, w_down, topk=TOPK, renormalize=True
    )
    assert out.shape == (T, H)
    assert out.dtype == x.dtype
    # bf16 operands vs f32 reference -> loosened tolerance.
    assert jnp.allclose(out.astype(jnp.float32), ref, atol=2e-2, rtol=5e-2), \
        "mismatch vs reference"

    print("KERNEL_OK")
</pallas_src>

<mosaic_0001>
module attributes {stable_mosaic.version = 11 : i64} {
  func.func @_moe_expert_kernel(%arg0: i32, %arg1: i32, %arg2: i32, %arg3: memref<16xi32, #tpu.memory_space<smem>>, %arg4: memref<16xi32, #tpu.memory_space<smem>>, %arg5: memref<8x128xbf16, #tpu.memory_space<vmem>>, %arg6: memref<1x1x128x256xbf16, #tpu.memory_space<vmem>>, %arg7: memref<1x1x128x128xbf16, #tpu.memory_space<vmem>>, %arg8: memref<1x8x1xf32, #tpu.memory_space<vmem>>, %arg9: memref<8x128xbf16, #tpu.memory_space<vmem>>, %arg10: memref<8x128xf32, #tpu.memory_space<vmem>>) attributes {dimension_semantics = [#tpu.dimension_semantics<arbitrary>, #tpu.dimension_semantics<arbitrary>, #tpu.dimension_semantics<arbitrary>], iteration_bounds = array<i64: 1, 16, 2>, scalar_prefetch = 2 : i64, scratch_operands = 1 : i64, tpu.core_type = #tpu.core_type<tc>, window_params = [{transform_indices = @transform_0, window_bounds = array<i64: 8, 128>}, {transform_indices = @transform_1, window_bounds = array<i64: 1, 1, 128, 256>}, {transform_indices = @transform_2, window_bounds = array<i64: 1, 1, 128, 128>}, {transform_indices = @transform_3, window_bounds = array<i64: 1, 8, 1>}, {transform_indices = @transform_4, window_bounds = array<i64: 8, 128>}]} {
    %c0_i32 = arith.constant 0 : i32
    %0 = arith.cmpi eq, %arg1, %c0_i32 : i32
    %c0_i32_0 = arith.constant 0 : i32
    %1 = arith.cmpi eq, %arg2, %c0_i32_0 : i32
    %2 = arith.andi %0, %1 : i1
    %3 = arith.extui %2 : i1 to i32
    %c0_i32_1 = arith.constant 0 : i32
    %4 = arith.cmpi ne, %3, %c0_i32_1 : i32
    scf.if %4 {
      %cst = arith.constant 0.000000e+00 : f32
      %15 = vector.broadcast %cst : f32 to vector<8x128xf32>
      %c0 = arith.constant 0 : index
      %c0_5 = arith.constant 0 : index
      %16 = vector.load %arg10[%c0, %c0_5] : memref<8x128xf32, #tpu.memory_space<vmem>>, vector<8x128xf32>
      tpu.vector_store %arg10[%c0, %c0_5], %15 {strides = array<i32>} : memref<8x128xf32, #tpu.memory_space<vmem>>, vector<8x128xf32>,
    } else {
    }
    %5 = arith.index_cast %arg1 : i32 to index
    %6 = memref.load %arg4[%5] : memref<16xi32, #tpu.memory_space<smem>>
    %c1_i32 = arith.constant 1 : i32
    %7 = arith.cmpi eq, %6, %c1_i32 : i32
    %8 = arith.extui %7 : i1 to i32
    %c0_i32_2 = arith.constant 0 : i32
    %9 = arith.cmpi ne, %8, %c0_i32_2 : i32
    scf.if %9 {
      %c0 = arith.constant 0 : index
      %c0_5 = arith.constant 0 : index
      %15 = vector.load %arg5[%c0, %c0_5] : memref<8x128xbf16, #tpu.memory_space<vmem>>, vector<8x128xbf16>
      %c0_6 = arith.constant 0 : index
      %c0_7 = arith.constant 0 : index
      %c0_8 = arith.constant 0 : index
      %c0_9 = arith.constant 0 : index
      %16 = vector.load %arg6[%c0_6, %c0_7, %c0_8, %c0_9] : memref<1x1x128x256xbf16, #tpu.memory_space<vmem>>, vector<1x1x128x256xbf16>
      %17 = vector.shape_cast %16 : vector<1x1x128x256xbf16> to vector<128x256xbf16>
      %cst = arith.constant dense<0.000000e+00> : vector<8x256xf32>
      %18 = tpu.matmul %15, %17, %cst {dimension_numbers = #tpu.dot_dimension_numbers<[1], [0], [0], [1], [0, 0, 1, 1], [], []>} : vector<8x128xbf16>, vector<128x256xbf16>, vector<8x256xf32> -> vector<8x256xf32>
      %19 = vector.extract_strided_slice %18 {offsets = [0, 0], sizes = [8, 128], strides = [1, 1]} : vector<8x256xf32> to vector<8x128xf32>
      %20 = vector.extract_strided_slice %18 {offsets = [0, 128], sizes = [8, 128], strides = [1, 1]} : vector<8x256xf32> to vector<8x128xf32>
      %21 = arith.negf %19 : vector<8x128xf32>
      %22 = math.exp %21 : vector<8x128xf32>
      %cst_10 = arith.constant 1.000000e+00 : f32
      %23 = vector.broadcast %cst_10 : f32 to vector<8x128xf32>
      %24 = arith.addf %23, %22 : vector<8x128xf32>
      %25 = arith.divf %23, %24 : vector<8x128xf32>
      %26 = arith.mulf %19, %25 : vector<8x128xf32>
      %27 = arith.mulf %26, %20 : vector<8x128xf32>
      %c0_11 = arith.constant 0 : index
      %c0_12 = arith.constant 0 : index
      %c0_13 = arith.constant 0 : index
      %28 = vector.load %arg8[%c0_11, %c0_12, %c0_13] : memref<1x8x1xf32, #tpu.memory_space<vmem>>, vector<1x8x1xf32>
      %29 = vector.shape_cast %28 : vector<1x8x1xf32> to vector<8x1xf32>
      %30 = vector.broadcast %29 : vector<8x1xf32> to vector<8x128xf32>
      %31 = arith.mulf %27, %30 : vector<8x128xf32>
      %c0_14 = arith.constant 0 : index
      %c0_15 = arith.constant 0 : index
      %32 = vector.load %arg10[%c0_14, %c0_15] : memref<8x128xf32, #tpu.memory_space<vmem>>, vector<8x128xf32>
      %33 = arith.truncf %31 : vector<8x128xf32> to vector<8x128xbf16>
      %c0_16 = arith.constant 0 : index
      %c0_17 = arith.constant 0 : index
      %c0_18 = arith.constant 0 : index
      %c0_19 = arith.constant 0 : index
      %34 = vector.load %arg7[%c0_16, %c0_17, %c0_18, %c0_19] : memref<1x1x128x128xbf16, #tpu.memory_space<vmem>>, vector<1x1x128x128xbf16>
      %35 = vector.shape_cast %34 : vector<1x1x128x128xbf16> to vector<128x128xbf16>
      %cst_20 = arith.constant dense<0.000000e+00> : vector<8x128xf32>
      %36 = tpu.matmul %33, %35, %cst_20 {dimension_numbers = #tpu.dot_dimension_numbers<[1], [0], [0], [1], [0, 0, 1, 1], [], []>} : vector<8x128xbf16>, vector<128x128xbf16>, vector<8x128xf32> -> vector<8x128xf32>
      %37 = arith.addf %32, %36 : vector<8x128xf32>
      %c0_21 = arith.constant 0 : index
      %c0_22 = arith.constant 0 : index
      %38 = vector.load %arg10[%c0_21, %c0_22] : memref<8x128xf32, #tpu.memory_space<vmem>>, vector<8x128xf32>
      tpu.vector_store %arg10[%c0_21, %c0_22], %37 {strides = array<i32>} : memref<8x128xf32, #tpu.memory_space<vmem>>, vector<8x128xf32>,
    } else {
    }
    %c15_i32 = arith.constant 15 : i32
    %10 = arith.cmpi eq, %arg1, %c15_i32 : i32
    %c1_i32_3 = arith.constant 1 : i32
    %11 = arith.cmpi eq, %arg2, %c1_i32_3 : i32
    %12 = arith.andi %10, %11 : i1
    %13 = arith.extui %12 : i1 to i32
    %c0_i32_4 = arith.constant 0 : i32
    %14 = arith.cmpi ne, %13, %c0_i32_4 : i32
    scf.if %14 {
      %c0 = arith.constant 0 : index
      %c0_5 = arith.constant 0 : index
      %15 = vector.load %arg10[%c0, %c0_5] : memref<8x128xf32, #tpu.memory_space<vmem>>, vector<8x128xf32>
      %16 = arith.truncf %15 : vector<8x128xf32> to vector<8x128xbf16>
      %c0_6 = arith.constant 0 : index
      %c0_7 = arith.constant 0 : index
      %17 = vector.load %arg9[%c0_6, %c0_7] : memref<8x128xbf16, #tpu.memory_space<vmem>>, vector<8x128xbf16>
      tpu.vector_store %arg9[%c0_6, %c0_7], %16 {strides = array<i32>} : memref<8x128xbf16, #tpu.memory_space<vmem>>, vector<8x128xbf16>,
    } else {
    }
    return
  }
  func.func @transform_0(%arg0: i32, %arg1: i32, %arg2: i32, %arg3: memref<16xi32, #tpu.memory_space<smem>>, %arg4: memref<16xi32, #tpu.memory_space<smem>>) -> (i32, i32) {
    %c0_i32 = arith.constant 0 : i32
    %c0_i32_0 = arith.constant 0 : i32
    return %arg0, %c0_i32 : i32, i32
  }
  func.func @transform_1(%arg0: i32, %arg1: i32, %arg2: i32, %arg3: memref<16xi32, #tpu.memory_space<smem>>, %arg4: memref<16xi32, #tpu.memory_space<smem>>) -> (i32, i32, i32, i32) {
    %0 = arith.index_cast %arg1 : i32 to index
    %1 = memref.load %arg4[%0] : memref<16xi32, #tpu.memory_space<smem>>
    %2 = arith.muli %arg2, %1 : i32
    %c1_i32 = arith.constant 1 : i32
    %3 = arith.subi %c1_i32, %1 : i32
    %c1_i32_0 = arith.constant 1 : i32
    %4 = arith.muli %c1_i32_0, %3 : i32
    %5 = arith.addi %2, %4 : i32
    %6 = arith.index_cast %arg1 : i32 to index
    %7 = memref.load %arg3[%6] : memref<16xi32, #tpu.memory_space<smem>>
    %c0_i32 = arith.constant 0 : i32
    %c0_i32_1 = arith.constant 0 : i32
    %c0_i32_2 = arith.constant 0 : i32
    return %7, %5, %c0_i32, %c0_i32_1 : i32, i32, i32, i32
  }
  func.func @transform_2(%arg0: i32, %arg1: i32, %arg2: i32, %arg3: memref<16xi32, #tpu.memory_space<smem>>, %arg4: memref<16xi32, #tpu.memory_space<smem>>) -> (i32, i32, i32, i32) {
    %0 = arith.index_cast %arg1 : i32 to index
    %1 = memref.load %arg4[%0] : memref<16xi32, #tpu.memory_space<smem>>
    %2 = arith.muli %arg2, %1 : i32
    %c1_i32 = arith.constant 1 : i32
    %3 = arith.subi %c1_i32, %1 : i32
    %c1_i32_0 = arith.constant 1 : i32
    %4 = arith.muli %c1_i32_0, %3 : i32
    %5 = arith.addi %2, %4 : i32
    %6 = arith.index_cast %arg1 : i32 to index
    %7 = memref.load %arg3[%6] : memref<16xi32, #tpu.memory_space<smem>>
    %c0_i32 = arith.constant 0 : i32
    %c0_i32_1 = arith.constant 0 : i32
    %c0_i32_2 = arith.constant 0 : i32
    return %7, %5, %c0_i32, %c0_i32_1 : i32, i32, i32, i32
  }
  func.func @transform_3(%arg0: i32, %arg1: i32, %arg2: i32, %arg3: memref<16xi32, #tpu.memory_space<smem>>, %arg4: memref<16xi32, #tpu.memory_space<smem>>) -> (i32, i32, i32) {
    %c0_i32 = arith.constant 0 : i32
    %c0_i32_0 = arith.constant 0 : i32
    return %arg1, %arg0, %c0_i32 : i32, i32, i32
  }
  func.func @transform_4(%arg0: i32, %arg1: i32, %arg2: i32, %arg3: memref<16xi32, #tpu.memory_space<smem>>, %arg4: memref<16xi32, #tpu.memory_space<smem>>) -> (i32, i32) {
    %c0_i32 = arith.constant 0 : i32
    %c0_i32_0 = arith.constant 0 : i32
    return %arg0, %c0_i32 : i32, i32
  }
}

</mosaic_0001>

<llo_original>
// kernel: tpu_custom_call.1
$region0: #{tpu_custom_call.1}
  #allocation0 [shape = 'u32[]', space=smem, size = 0x4, offset = 0x4, fixed_abs, tag = 'smem constant byte address 0x4 - core index']
  #allocation1 [shape = 'u32[72,128]{1,0:T(1,128)}', space=vmem, size = 0x9000, scoped, tag = 'internal scratch']
  #allocation2 [shape = 'f32[8,128]{1,0:T(8,128)}', space=vmem, size = 0x1000, scoped, tag = 'scratch operand']
  #allocation3 [shape = 's32[1]{0}', space=sflag, size = 0x4, scoped, tag = 'scoped memory for tpu_custom_call.1']
  #allocation4 [shape = 'u8[512]{0}', space=smem, size = 0x200, scoped, tag = 'prefetched SMEM operand 0']
  #allocation5 [shape = 'u8[512]{0}', space=smem, size = 0x200, scoped, tag = 'prefetched SMEM operand 1']
  %s0 = inlined_call_operand.hbm [shape: s32[16], index: 0, kind: input, shape index: {}]
  %s1 = inlined_call_operand.hbm [shape: s32[16], index: 1, kind: input, shape index: {}]
  %s2 = inlined_call_operand.hbm [shape: bf16[8,128], index: 2, kind: input, shape index: {}]
  %s3 = inlined_call_operand.hbm [shape: bf16[32,2,128,256], index: 3, kind: input, shape index: {}]
  %s4 = inlined_call_operand.hbm [shape: bf16[32,2,128,128], index: 4, kind: input, shape index: {}]
  %s5 = inlined_call_operand.vmem [shape: f32[16,8,1], index: 5, kind: input, shape index: {}]
  %s6 = inlined_call_operand.hbm [shape: bf16[8,128], index: 6, kind: output, shape index: {}]
  %s7 = sld [smem:[#allocation0]]
  $region73: #{tpu_custom_call.1} parent=0
    _
  %s9 = ssub.s32 1, %s7
  %s10 = scalar_select 0, %s9, %s7
  %s12 = sshll.u32 %s0, 4
  %s13 = int_to_ptr.hbm [resolvable:$true] %s12
  %15 = dma.hbm_to_smem %s13, 16, [#allocation4], [#allocation3]
  %s17 = sshll.u32 %s1, 4
  %s18 = int_to_ptr.hbm [resolvable:$true] %s17
  %20 = dma.hbm_to_smem %s18, 16, [#allocation5], [#allocation3]
  %22 = dma.done [#allocation3], 32
  %23 = sfence
  $region1: #{tpu_custom_call.1} parent=0
    #allocation6 [shape = 'u8[2048]{0}', space=vmem, size = 0x800, scoped, tag = 'input window, operand 2, single buffered']
    #allocation7 [shape = 's32[2]{0}', space=sflag, size = 0x8, scoped, tag = 'scoped memory for tpu_custom_call.1']
    #allocation8 [shape = 's32[2]{0}', space=sflag, size = 0x8, scoped, tag = 'scoped memory for tpu_custom_call.1']
    #allocation9 [shape = 'u8[131072]{0}', space=vmem, size = 0x20000, scoped, tag = 'input window, operand 3']
    #allocation10 [shape = 's32[2]{0}', space=sflag, size = 0x8, scoped, tag = 'scoped memory for tpu_custom_call.1']
    #allocation11 [shape = 'u8[65536]{0}', space=vmem, size = 0x10000, scoped, tag = 'input window, operand 4']
    #allocation12 [shape = 'u8[2048]{0}', space=vmem, size = 0x800, scoped, tag = 'output window, operand 0, single buffered']
    %24 = vsyncpa [#allocation7], 0
    %25 = vsyncpa [#allocation10], 0
    %s26 = scalar_lea.sflag [#allocation10], 1
    %27 = vsyncpa %s26, 0
    %28 = vsyncpa [#allocation8], 0
    loop: start=0, step=1, limit=34
    $region2: #{tpu_custom_call.1} parent=1 // loop_pre_header
      _
    $region3: #{tpu_custom_call.1} parent=1 // loop_header
      %s30 = sphi 0, %s34
      %p31 = scmp.ge.s32.totalorder %s30, 34
      %s37 = sphi 0, %s56
      %s38 = sphi 0, %s52
      %s39 = sphi 0, %s48
      %s40 = sphi 0, %s37
      %s41 = sphi 0, %s38
      %s42 = sphi 0, %s39
      %s43 = sphi 0, %s40
      %s44 = sphi 0, %s41
      %s45 = sphi 0, %s42
      %s59 = sphi 0, %s61
      %s62 = sphi 0, %s59
      %s63 = sphi 0, %s62
      %s79 = sphi 0, %s63
      %s97 = sphi 0, %s99
      %s100 = sphi 0, %s97
      %s101 = sphi 0, %s100
      %s117 = sphi 0, %s101
      %s135 = sphi 0, %s137
      %s138 = sphi 0, %s135
      %s139 = sphi 0, %s138
      %s155 = sphi 0, %s139
      %s163 = sphi 0, %s165
      %s166 = sphi 0, %s163
      %s167 = sphi 0, %s166
      %s183 = sphi 0, %s167
      %s189 = sphi 0, %s191
      %s192 = sphi 0, %s189
      %s193 = sphi 0, %s192
      %s209 = sphi 0, %s193
    $region4: #{tpu_custom_call.1} parent=1 // loop_header_branch
      %33 = sbr.rel (%p31) target = $region8
    $region5: #{tpu_custom_call.1} parent=1 // loop_body
      %s35 = ssub.s32 %s30, 1
      %s36 = ssub.s32 %s30, 2
      %s46 = sadd.s32 1, %s39
      %p47 = scmp.ge.s32.totalorder %s46, 2
      %s48 = scalar_select %p47, 0, %s46
      %s49 = sadd.s32 1, %s38
      %s50 = scalar_select %p47, %s49, %s38
      %p51 = scmp.ge.s32.totalorder %s50, 16
      %s52 = scalar_select %p51, 0, %s50
      %s53 = sadd.s32 1, %s37
      %s54 = scalar_select %p51, %s53, %s37
      %p55 = scmp.ge.s32.totalorder %s54, 1
      %s56 = scalar_select %p55, 0, %s54
      %s57 = ssub.s32 %s37, %s56
      %p58 = scmp.eq.s32.totalorder %s57, 0
      %s60 = sadd.s32 %s59, 1
      %s61 = scalar_select %p58, %s59, %s60
      %p64 = pneg %p58
      %p65 = scmp.eq.s32.totalorder %s30, 31
      %p66 = por %p64, %p65
      %p67 = scmp.ne.s32.totalorder %s59, %s62
      %p68 = scmp.eq.s32.totalorder %s30, 0
      %p69 = por %p67, %p68
      %p70 = scmp.ne.s32.totalorder %s59, %s62
      %p71 = scmp.eq.s32.totalorder %s35, 31
      %p72 = por %p70, %p71
      %p73 = scmp.ne.s32.totalorder %s62, %s63
      %p74 = scmp.eq.s32.totalorder %s35, 0
      %p75 = por %p73, %p74
      %p76 = scmp.ne.s32.totalorder %s62, %s63
      %p77 = scmp.eq.s32.totalorder %s36, 31
      %p78 = por %p76, %p77
      %p80 = scmp.ne.s32.totalorder %s63, %s79
      %p81 = scmp.eq.s32.totalorder %s36, 0
      %p82 = por %p80, %p81
      %s83 = sld [smem:[#allocation5 + %s38]]
      %s84 = smul.u32 %s39, %s83
      %s85 = ssub.s32 1, %s83
      %s86 = sadd.s32 %s84, %s85
      %s87 = sld [smem:[#allocation4 + %s38]]
      %s88 = sld [smem:[#allocation5 + %s52]]
      %s89 = smul.u32 %s48, %s88
      %s90 = ssub.s32 1, %s88
      %s91 = sadd.s32 %s89, %s90
      %s92 = sld [smem:[#allocation4 + %s52]]
      %s93 = ssub.s32 %s87, %s92
      %s94 = ssub.s32 %s86, %s91
      %s95 = sor.u32 %s93, %s94
      %p96 = scmp.eq.s32.totalorder %s95, 0
      %s98 = sadd.s32 %s97, 1
      %s99 = scalar_select %p96, %s97, %s98
      %p102 = pneg %p96
      %p103 = scmp.eq.s32.totalorder %s30, 31
      %p104 = por %p102, %p103
      %p105 = scmp.ne.s32.totalorder %s97, %s100
      %p106 = scmp.eq.s32.totalorder %s30, 0
      %p107 = por %p105, %p106
      %p108 = scmp.ne.s32.totalorder %s97, %s100
      %p109 = scmp.eq.s32.totalorder %s35, 31
      %p110 = por %p108, %p109
      %p111 = scmp.ne.s32.totalorder %s100, %s101
      %p112 = scmp.eq.s32.totalorder %s35, 0
      %p113 = por %p111, %p112
      %p114 = scmp.ne.s32.totalorder %s100, %s101
      %p115 = scmp.eq.s32.totalorder %s36, 31
      %p116 = por %p114, %p115
      %p118 = scmp.ne.s32.totalorder %s101, %s117
      %p119 = scmp.eq.s32.totalorder %s36, 0
      %p120 = por %p118, %p119
      %s121 = sld [smem:[#allocation5 + %s38]]
      %s122 = smul.u32 %s39, %s121
      %s123 = ssub.s32 1, %s121
      %s124 = sadd.s32 %s122, %s123
      %s125 = sld [smem:[#allocation4 + %s38]]
      %s126 = sld [smem:[#allocation5 + %s52]]
      %s127 = smul.u32 %s48, %s126
      %s128 = ssub.s32 1, %s126
      %s129 = sadd.s32 %s127, %s128
      %s130 = sld [smem:[#allocation4 + %s52]]
      %s131 = ssub.s32 %s125, %s130
      %s132 = ssub.s32 %s124, %s129
      %s133 = sor.u32 %s131, %s132
      %p134 = scmp.eq.s32.totalorder %s133, 0
      %s136 = sadd.s32 %s135, 1
      %s137 = scalar_select %p134, %s135, %s136
      %p140 = pneg %p134
      %p141 = scmp.eq.s32.totalorder %s30, 31
      %p142 = por %p140, %p141
      %p143 = scmp.ne.s32.totalorder %s135, %s138
      %p144 = scmp.eq.s32.totalorder %s30, 0
      %p145 = por %p143, %p144
      %p146 = scmp.ne.s32.totalorder %s135, %s138
      %p147 = scmp.eq.s32.totalorder %s35, 31
      %p148 = por %p146, %p147
      %p149 = scmp.ne.s32.totalorder %s138, %s139
      %p150 = scmp.eq.s32.totalorder %s35, 0
      %p151 = por %p149, %p150
      %p152 = scmp.ne.s32.totalorder %s138, %s139
      %p153 = scmp.eq.s32.totalorder %s36, 31
      %p154 = por %p152, %p153
      %p156 = scmp.ne.s32.totalorder %s139, %s155
      %p157 = scmp.eq.s32.totalorder %s36, 0
      %p158 = por %p156, %p157
      %s159 = ssub.s32 %s38, %s52
      %s160 = ssub.s32 %s37, %s56
      %s161 = sor.u32 %s159, %s160
      %p162 = scmp.eq.s32.totalorder %s161, 0
      %s164 = sadd.s32 %s163, 1
      %s165 = scalar_select %p162, %s163, %s164
      %p168 = pneg %p162
      %p169 = scmp.eq.s32.totalorder %s30, 31
      %p170 = por %p168, %p169
      %p171 = scmp.ne.s32.totalorder %s163, %s166
      %p172 = scmp.eq.s32.totalorder %s30, 0
      %p173 = por %p171, %p172
      %p174 = scmp.ne.s32.totalorder %s163, %s166
      %p175 = scmp.eq.s32.totalorder %s35, 31
      %p176 = por %p174, %p175
      %p177 = scmp.ne.s32.totalorder %s166, %s167
      %p178 = scmp.eq.s32.totalorder %s35, 0
      %p179 = por %p177, %p178
      %p180 = scmp.ne.s32.totalorder %s166, %s167
      %p181 = scmp.eq.s32.totalorder %s36, 31
      %p182 = por %p180, %p181
      %p184 = scmp.ne.s32.totalorder %s167, %s183
      %p185 = scmp.eq.s32.totalorder %s36, 0
      %p186 = por %p184, %p185
      %s187 = ssub.s32 %s37, %s56
      %p188 = scmp.eq.s32.totalorder %s187, 0
      %s190 = sadd.s32 %s189, 1
      %s191 = scalar_select %p188, %s189, %s190
      %p194 = pneg %p188
      %p195 = scmp.eq.s32.totalorder %s30, 31
      %p196 = por %p194, %p195
      %p197 = scmp.ne.s32.totalorder %s189, %s192
      %p198 = scmp.eq.s32.totalorder %s30, 0
      %p199 = por %p197, %p198
      %p200 = scmp.ne.s32.totalorder %s189, %s192
      %p201 = scmp.eq.s32.totalorder %s35, 31
      %p202 = por %p200, %p201
      %p203 = scmp.ne.s32.totalorder %s192, %s193
      %p204 = scmp.eq.s32.totalorder %s35, 0
      %p205 = por %p203, %p204
      %p206 = scmp.ne.s32.totalorder %s192, %s193
      %p207 = scmp.eq.s32.totalorder %s36, 31
      %p208 = por %p206, %p207
      %p210 = scmp.ne.s32.totalorder %s193, %s209
      %p211 = scmp.eq.s32.totalorder %s36, 0
      %p212 = por %p210, %p211
      %p213 = scmp.le.s32.totalorder 1, %s30
      %p214 = scmp.lt.s32.totalorder %s30, 33
      %p215 = pnand %p213, %p214
      %p216 = pneg %p215
      // Predicated region
      $region9: #{tpu_custom_call.1} parent=5 // pred_check
        _
      $region10: #{tpu_custom_call.1} parent=5 // pred_check_branch
        %218 = sbr.rel (%p215) target = $region12
      $region11: #{tpu_custom_call.1} parent=5 // pred_region
        %s219 = ssub.s32 %s30, 1
        // Predicated region
        $region13: #{tpu_custom_call.1} parent=11 // pred_check
          %p220 = pneg %p75
        $region14: #{tpu_custom_call.1} parent=11 // pred_check_branch
          %222 = sbr.rel (%p220) target = $region16
        $region15: #{tpu_custom_call.1} parent=11 // pred_region
          %224 = vsyncadd [#allocation7], 0
          %s225 = smul.addr %s40, 4
          %s226 = scalar_lea.hbm %s2, %s225
          %s228 = sshll.u32 %s226, 4
          %s229 = int_to_ptr.hbm [resolvable:$true] %s228
          %s230 = sshll.u32 [#allocation6], 4
          %s231 = int_to_ptr.vmem [resolvable:$true] %s230
          %233 = dma.hbm_to_vmem [thread:$0]  %s229, 64, %s231, [#allocation7]
        $region16: #{tpu_custom_call.1} parent=11 // pred_fallthru
          _
      $region12: #{tpu_custom_call.1} parent=5 // pred_fallthru
        _
      %p234 = scmp.lt.s32.totalorder %s30, 32
      // Predicated region
      $region17: #{tpu_custom_call.1} parent=5 // pred_check
        %p235 = pneg %p234
      $region18: #{tpu_custom_call.1} parent=5 // pred_check_branch
        %237 = sbr.rel (%p235) target = $region20
      $region19: #{tpu_custom_call.1} parent=5 // pred_region
        // Predicated region
        $region21: #{tpu_custom_call.1} parent=19 // pred_check
          %p238 = pneg %p107
        $region22: #{tpu_custom_call.1} parent=19 // pred_check_branch
          %240 = sbr.rel (%p238) target = $region24
        $region23: #{tpu_custom_call.1} parent=19 // pred_region
          %s241 = sand.u32 %s30, 1
          %s242 = scalar_lea.sflag [#allocation10], %s241
          %s243 = sand.u32 %s97, 1
          %s244 = smul.addr %s243, 128
          %s245 = scalar_lea.vmem [#allocation9], %s244
          %s246 = sld [smem:[#allocation5 + %s38]]
          %s247 = smul.u32 %s39, %s246
          %s248 = ssub.s32 1, %s246
          %s249 = sadd.s32 %s247, %s248
          %s250 = sld [smem:[#allocation4 + %s38]]
          %252 = vsyncadd %s242, 0
          %s253 = smul.addr %s249, 32
          %s254 = smul.addr %s250, 64
          %s255 = sadd.s32 %s253, %s254
          %s256 = smul.addr %s255, 4
          %s257 = scalar_lea.hbm %s3, %s256
          %s258 = sshll.u32 %s257, 4
          %s259 = int_to_ptr.hbm [resolvable:$true] %s258
          %s260 = sshll.u32 %s245, 4
          %s261 = int_to_ptr.vmem [resolvable:$true] %s260
          %266 = dma.hbm_to_vmem [thread:$0]  %s259, 2048, %s261, %s242, 128, 128, 8
        $region24: #{tpu_custom_call.1} parent=19 // pred_fallthru
          _
        // Predicated region
        $region25: #{tpu_custom_call.1} parent=19 // pred_check
          %p267 = pneg %p145
        $region26: #{tpu_custom_call.1} parent=19 // pred_check_branch
          %269 = sbr.rel (%p267) target = $region28
        $region27: #{tpu_custom_call.1} parent=19 // pred_region
          %s270 = sand.u32 %s30, 1
          %s271 = scalar_lea.sflag [#allocation10], %s270
          %s272 = sand.u32 %s135, 1
          %s273 = smul.addr %s272, 64
          %s274 = scalar_lea.vmem [#allocation11], %s273
          %s275 = sld [smem:[#allocation5 + %s38]]
          %s276 = smul.u32 %s39, %s275
          %s277 = ssub.s32 1, %s275
          %s278 = sadd.s32 %s276, %s277
          %s279 = sld [smem:[#allocation4 + %s38]]
          %281 = vsyncadd %s271, 0
          %s282 = smul.addr %s278, 16
          %s283 = smul.addr %s279, 32
          %s284 = sadd.s32 %s282, %s283
          %s285 = smul.addr %s284, 4
          %s286 = scalar_lea.hbm %s4, %s285
          %s287 = sshll.u32 %s286, 4
          %s288 = int_to_ptr.hbm [resolvable:$true] %s287
          %s289 = sshll.u32 %s274, 4
          %s290 = int_to_ptr.vmem [resolvable:$true] %s289
          %295 = dma.hbm_to_vmem [thread:$0]  %s288, 1024, %s290, %s271, 64, 64, 4
        $region28: #{tpu_custom_call.1} parent=19 // pred_fallthru
          _
        // Predicated region
        $region29: #{tpu_custom_call.1} parent=19 // pred_check
          %p296 = pneg %p173
        $region30: #{tpu_custom_call.1} parent=19 // pred_check_branch
          %298 = sbr.rel (%p296) target = $region32
        $region31: #{tpu_custom_call.1} parent=19 // pred_region
          %p299 = scmp.lt.s32.totalorder %s38, 15
          %s300 = scalar_select %p299, %s38, 15
          %p301 = scmp.lt.s32.totalorder %s37, 0
          %s302 = scalar_select %p301, %s37, 0
          %s303 = sadd.s32 %s302, %s300
          %s304 = smul.addr %s303, 8
          %s305 = scalar_lea.vmem %s5, %s304
        $region32: #{tpu_custom_call.1} parent=19 // pred_fallthru
          _
      $region20: #{tpu_custom_call.1} parent=5 // pred_fallthru
        _
      %p306 = scmp.le.s32.totalorder 1, %s30
      %p307 = scmp.lt.s32.totalorder %s30, 33
      %p308 = pnand %p306, %p307
      %p309 = pneg %p308
      // Predicated region
      $region33: #{tpu_custom_call.1} parent=5 // pred_check
        _
      $region34: #{tpu_custom_call.1} parent=5 // pred_check_branch
        %311 = sbr.rel (%p308) target = $region36
      $region35: #{tpu_custom_call.1} parent=5 // pred_region
        %s312 = ssub.s32 %s30, 1
        // Predicated region
        $region37: #{tpu_custom_call.1} parent=35 // pred_check
          %p313 = pneg %p75
        $region38: #{tpu_custom_call.1} parent=35 // pred_check_branch
          %315 = sbr.rel (%p313) target = $region40
        $region39: #{tpu_custom_call.1} parent=35 // pred_region
          %317 = dma.done [#allocation7], 64
        $region40: #{tpu_custom_call.1} parent=35 // pred_fallthru
          _
        %s318 = sand.u32 %s35, 1
        %s319 = scalar_lea.sflag [#allocation10], %s318
        %s320 = sand.u32 %s100, 1
        %s321 = smul.addr %s320, 128
        %s322 = scalar_lea.vmem [#allocation9], %s321
        // Predicated region
        $region41: #{tpu_custom_call.1} parent=35 // pred_check
          %p323 = pneg %p113
        $region42: #{tpu_custom_call.1} parent=35 // pred_check_branch
          %325 = sbr.rel (%p323) target = $region44
        $region43: #{tpu_custom_call.1} parent=35 // pred_region
          %327 = dma.done %s319, 2048
        $region44: #{tpu_custom_call.1} parent=35 // pred_fallthru
          _
        %s328 = sand.u32 %s35, 1
        %s329 = scalar_lea.sflag [#allocation10], %s328
        %s330 = sand.u32 %s138, 1
        %s331 = smul.addr %s330, 64
        %s332 = scalar_lea.vmem [#allocation11], %s331
        // Predicated region
        $region45: #{tpu_custom_call.1} parent=35 // pred_check
          %p333 = pneg %p151
        $region46: #{tpu_custom_call.1} parent=35 // pred_check_branch
          %335 = sbr.rel (%p333) target = $region48
        $region47: #{tpu_custom_call.1} parent=35 // pred_region
          %337 = dma.done %s329, 1024
        $region48: #{tpu_custom_call.1} parent=35 // pred_fallthru
          _
        %p338 = pneg %p75
        %p339 = pneg %p72
        %s340 = sand.u32 %s35, 1
        %s341 = scalar_lea.sflag [#allocation10], %s340
        %s342 = sand.u32 %s100, 1
        %s343 = smul.addr %s342, 128
        %s344 = scalar_lea.vmem [#allocation9], %s343
        %p345 = pneg %p113
        %p346 = pneg %p110
        %s347 = sand.u32 %s35, 1
        %s348 = scalar_lea.sflag [#allocation10], %s347
        %s349 = sand.u32 %s138, 1
        %s350 = smul.addr %s349, 64
        %s351 = scalar_lea.vmem [#allocation11], %s350
        %p352 = pneg %p151
        %p353 = pneg %p148
        %p354 = scmp.lt.s32.totalorder %s41, 15
        %s355 = scalar_select %p354, %s41, 15
        %p356 = scmp.lt.s32.totalorder %s40, 0
        %s357 = scalar_select %p356, %s40, 0
        %s358 = sadd.s32 %s357, %s355
        %s359 = smul.addr %s358, 8
        %s360 = scalar_lea.vmem %s5, %s359
        %p361 = pneg %p179
        %p362 = pneg %p176
        %p363 = pneg %p205
        %p364 = pneg %p202
        %s365 = sld [smem:[#allocation5 + %s41]]
        %s366 = smul.u32 %s42, %s365
        %s367 = ssub.s32 1, %s365
        %s368 = sadd.s32 %s366, %s367
        %s369 = sld [smem:[#allocation4 + %s41]]
        %s370 = sld [smem:[#allocation5 + %s41]]
        %s371 = smul.u32 %s42, %s370
        %s372 = ssub.s32 1, %s370
        %s373 = sadd.s32 %s371, %s372
        %s374 = sld [smem:[#allocation4 + %s41]]
        %p375 = scmp.lt.s32.totalorder %s41, 15
        %s376 = scalar_select %p375, %s41, 15
        %p377 = scmp.lt.s32.totalorder %s40, 0
        %s378 = scalar_select %p377, %s40, 0
        %s379 = sadd.s32 %s378, %s376
        %s380 = smul.addr %s379, 8
        %s381 = scalar_lea.vmem %s5, %s380
        %p382 = scmp.eq.s32.totalorder %s41, 0
        %p383 = scmp.eq.s32.totalorder %s42, 0
        %p384 = pnand %p382, %p383
        %p385 = pneg %p384
        // Predicated region
        $region49: #{tpu_custom_call.1} parent=35 // pred_check
          _
        $region50: #{tpu_custom_call.1} parent=35 // pred_check_branch
          %387 = sbr.rel (%p384) target = $region52
        $region51: #{tpu_custom_call.1} parent=35 // pred_region
          %388 = vst [vmem:[#allocation2] sm:$0xff] 0.0
        $region52: #{tpu_custom_call.1} parent=35 // pred_fallthru
          _
        %s389 = sld [smem:[#allocation5 + %s41]]
        %p390 = scmp.eq.s32.totalorder %s389, 1
        // Predicated region
        $region53: #{tpu_custom_call.1} parent=35 // pred_check
          %p391 = pneg %p390
        $region54: #{tpu_custom_call.1} parent=35 // pred_check_branch
          %393 = sbr.rel (%p391) target = $region56
        $region55: #{tpu_custom_call.1} parent=35 // pred_region
          %v394 = vld [vmem:[#allocation6] sm:$0xf]
          %v395 = vld [vmem:[%s322] sm:$0xff]
          %v396 = vld [vmem:[%s322 + $0x8] sm:$0xff]
          %v397 = vld [vmem:[%s322 + $0x10] sm:$0xff]
          %v398 = vld [vmem:[%s322 + $0x18] sm:$0xff]
          %v399 = vld [vmem:[%s322 + $0x20] sm:$0xff]
          %v400 = vld [vmem:[%s322 + $0x28] sm:$0xff]
          %v401 = vld [vmem:[%s322 + $0x30] sm:$0xff]
          %v402 = vld [vmem:[%s322 + $0x38] sm:$0xff]
          %v403 = vld [vmem:[%s322 + $0x40] sm:$0xff]
          %v404 = vld [vmem:[%s322 + $0x48] sm:$0xff]
          %v405 = vld [vmem:[%s322 + $0x50] sm:$0xff]
          %v406 = vld [vmem:[%s322 + $0x58] sm:$0xff]
          %v407 = vld [vmem:[%s322 + $0x60] sm:$0xff]
          %v408 = vld [vmem:[%s322 + $0x68] sm:$0xff]
          %v409 = vld [vmem:[%s322 + $0x70] sm:$0xff]
          %v410 = vld [vmem:[%s322 + $0x78] sm:$0xff]
          %v427 = vunpack.c.l.b16 %v395
          %v428 = vunpack.c.h.b16 %v395
          %v429 = vunpack.c.l.b16 %v396
          %v430 = vunpack.c.h.b16 %v396
          %v431 = vunpack.c.l.b16 %v397
          %v432 = vunpack.c.h.b16 %v397
          %v433 = vunpack.c.l.b16 %v398
          %v434 = vunpack.c.h.b16 %v398
          %v435 = vunpack.c.l.b16 %v399
          %v436 = vunpack.c.h.b16 %v399
          %v437 = vunpack.c.l.b16 %v400
          %v438 = vunpack.c.h.b16 %v400
          %v439 = vunpack.c.l.b16 %v401
          %v440 = vunpack.c.h.b16 %v401
          %v441 = vunpack.c.l.b16 %v402
          %v442 = vunpack.c.h.b16 %v402
          %v443 = vunpack.c.l.b16 %v403
          %v444 = vunpack.c.h.b16 %v403
          %v445 = vunpack.c.l.b16 %v404
          %v446 = vunpack.c.h.b16 %v404
          %v447 = vunpack.c.l.b16 %v405
          %v448 = vunpack.c.h.b16 %v405
          %v449 = vunpack.c.l.b16 %v406
          %v450 = vunpack.c.h.b16 %v406
          %v451 = vunpack.c.l.b16 %v407
          %v452 = vunpack.c.h.b16 %v407
          %v453 = vunpack.c.l.b16 %v408
          %v454 = vunpack.c.h.b16 %v408
          %v455 = vunpack.c.l.b16 %v409
          %v456 = vunpack.c.h.b16 %v409
          %v457 = vunpack.c.l.b16 %v410
          %v458 = vunpack.c.h.b16 %v410
          %v459 = vpack.c.b16 %v429, %v427
          %v460 = vpack.c.b16 %v430, %v428
          %v461 = vpack.c.b16 %v433, %v431
          %v462 = vpack.c.b16 %v434, %v432
          %v463 = vpack.c.b16 %v437, %v435
          %v464 = vpack.c.b16 %v438, %v436
          %v465 = vpack.c.b16 %v441, %v439
          %v466 = vpack.c.b16 %v442, %v440
          %v467 = vpack.c.b16 %v445, %v443
          %v468 = vpack.c.b16 %v446, %v444
          %v469 = vpack.c.b16 %v449, %v447
          %v470 = vpack.c.b16 %v450, %v448
          %v471 = vpack.c.b16 %v453, %v451
          %v472 = vpack.c.b16 %v454, %v452
          %v473 = vpack.c.b16 %v457, %v455
          %v474 = vpack.c.b16 %v458, %v456
          %491 = vmatpush.bf16.msra.mxu0 %v473
          %492 = vmatpush.bf16.msra.mxu0 %v471
          %493 = vmatpush.bf16.msra.mxu0 %v469
          %494 = vmatpush.bf16.msra.mxu0 %v467
          %495 = vmatpush.bf16.msra.mxu0 %v465
          %496 = vmatpush.bf16.msra.mxu0 %v463
          %497 = vmatpush.bf16.msra.mxu0 %v461
          %498 = vmatpush.bf16.msra.mxu0 %v459
          %499 = vmatmul.bf16.gmra.mxu0 %v394
          %v500 = vpop.f32.mrf.mxu0
          %v501 = vadd.f32 0.0, %v500
          %v502 = vpop.f32.mrf.mxu0
          %503 = vdwg.mxu0
          %504 = vmatpush.bf16.msra.mxu0 %v474
          %505 = vmatpush.bf16.msra.mxu0 %v472
          %506 = vmatpush.bf16.msra.mxu0 %v470
          %507 = vmatpush.bf16.msra.mxu0 %v468
          %508 = vmatpush.bf16.msra.mxu0 %v466
          %509 = vmatpush.bf16.msra.mxu0 %v464
          %510 = vmatpush.bf16.msra.mxu0 %v462
          %511 = vmatpush.bf16.msra.mxu0 %v460
          %512 = vmatmul.bf16.gmra.mxu0 %v394
          %v513 = vpop.f32.mrf.mxu0
          %v514 = vadd.f32 0.0, %v513
          %v515 = vpop.f32.mrf.mxu0
          %516 = vdwg.mxu0
          %v517 = vxor.u32 %v501, 2147483648
          %v518 = vmul.f32 %v517, 1.442695
          %v519 = vpow.pop %v518
          %v520 = vadd.f32 %v519, 1.0
          %v521 = vrcp.pop %v520
          %v522 = vmul.f32 %v520, %v521
          %v523 = vsub.f32 1.0, %v522
          %v524 = vmul.f32 %v521, %v523
          %v525 = vadd.f32 %v521, %v524
          %vm526 = vweird.f32 %v520
          %vm527 = vweird.f32 %v521
          %vm528 = vmor %vm526, %vm527
          %v529 = vsel %vm528, %v521, %v525
          %v530 = vand.u32 2147483647, %v520
          %vm531 = vcmp.eq.f32.partialorder %v530, 8.507059e+37
          %v532 = vand.u32 %v520, 2147483648
          %v533 = vor.u32 1.1754944e-38, %v532
          %v534 = vsel %vm531, %v533, %v529
          %v535 = vmul.f32 1.0, %v534
          %v536 = vmul.f32 %v501, %v535
          %v537 = vmul.f32 %v536, %v514
          %v538 = vld [vmem:[%s381] sm:$0xff]
          %540 = vset.pattern.permute.xlu0 0
          %541 = vperm.xlu0 %540, %v538
          %v542 = vpop.permute.xlu0 %541
          %v544 = vmul.f32 %v537, %v542
          %v545 = vld [vmem:[#allocation2] sm:$0xff]
          %v546 = vpack.c.bf16 %v544, %v544
          %v547 = vld [vmem:[%s332] sm:$0xf]
          %v548 = vld [vmem:[%s332 + $0x4] sm:$0xf]
          %v549 = vld [vmem:[%s332 + $0x8] sm:$0xf]
          %v550 = vld [vmem:[%s332 + $0xc] sm:$0xf]
          %v551 = vld [vmem:[%s332 + $0x10] sm:$0xf]
          %v552 = vld [vmem:[%s332 + $0x14] sm:$0xf]
          %v553 = vld [vmem:[%s332 + $0x18] sm:$0xf]
          %v554 = vld [vmem:[%s332 + $0x1c] sm:$0xf]
          %v555 = vld [vmem:[%s332 + $0x20] sm:$0xf]
          %v556 = vld [vmem:[%s332 + $0x24] sm:$0xf]
          %v557 = vld [vmem:[%s332 + $0x28] sm:$0xf]
          %v558 = vld [vmem:[%s332 + $0x2c] sm:$0xf]
          %v559 = vld [vmem:[%s332 + $0x30] sm:$0xf]
          %v560 = vld [vmem:[%s332 + $0x34] sm:$0xf]
          %v561 = vld [vmem:[%s332 + $0x38] sm:$0xf]
          %v562 = vld [vmem:[%s332 + $0x3c] sm:$0xf]
          %v579 = vunpack.c.l.b16 %v547
          %v580 = vunpack.c.l.b16 %v548
          %v581 = vunpack.c.l.b16 %v549
          %v582 = vunpack.c.l.b16 %v550
          %v583 = vunpack.c.l.b16 %v551
          %v584 = vunpack.c.l.b16 %v552
          %v585 = vunpack.c.l.b16 %v553
          %v586 = vunpack.c.l.b16 %v554
          %v587 = vunpack.c.l.b16 %v555
          %v588 = vunpack.c.l.b16 %v556
          %v589 = vunpack.c.l.b16 %v557
          %v590 = vunpack.c.l.b16 %v558
          %v591 = vunpack.c.l.b16 %v559
          %v592 = vunpack.c.l.b16 %v560
          %v593 = vunpack.c.l.b16 %v561
          %v594 = vunpack.c.l.b16 %v562
          %v595 = vpack.c.b16 %v580, %v579
          %v596 = vpack.c.b16 %v582, %v581
          %v597 = vpack.c.b16 %v584, %v583
          %v598 = vpack.c.b16 %v586, %v585
          %v599 = vpack.c.b16 %v588, %v587
          %v600 = vpack.c.b16 %v590, %v589
          %v601 = vpack.c.b16 %v592, %v591
          %v602 = vpack.c.b16 %v594, %v593
          %611 = vmatpush.bf16.msra.mxu0 %v602
          %612 = vmatpush.bf16.msra.mxu0 %v601
          %613 = vmatpush.bf16.msra.mxu0 %v600
          %614 = vmatpush.bf16.msra.mxu0 %v599
          %615 = vmatpush.bf16.msra.mxu0 %v598
          %616 = vmatpush.bf16.msra.mxu0 %v597
          %617 = vmatpush.bf16.msra.mxu0 %v596
          %618 = vmatpush.bf16.msra.mxu0 %v595
          %619 = vmatmul.bf16.gmra.mxu0 %v546
          %v620 = vpop.f32.mrf.mxu0
          %v621 = vadd.f32 0.0, %v620
          %v622 = vpop.f32.mrf.mxu0
          %623 = vdwg.mxu0
          %v624 = vadd.f32 %v545, %v621
          %625 = vst [vmem:[#allocation2] sm:$0xff] %v624
        $region56: #{tpu_custom_call.1} parent=35 // pred_fallthru
          _
        %p626 = scmp.eq.s32.totalorder %s41, 15
        %p627 = scmp.eq.s32.totalorder %s42, 1
        %p628 = pnand %p626, %p627
        %p629 = pneg %p628
        // Predicated region
        $region57: #{tpu_custom_call.1} parent=35 // pred_check
          _
        $region58: #{tpu_custom_call.1} parent=35 // pred_check_branch
          %631 = sbr.rel (%p628) target = $region60
        $region59: #{tpu_custom_call.1} parent=35 // pred_region
          %v632 = vld [vmem:[#allocation2] sm:$0xff]
          %v633 = vpack.c.bf16 %v632, %v632
          %634 = vst [vmem:[#allocation12] sm:$0xf] %v633
        $region60: #{tpu_custom_call.1} parent=35 // pred_fallthru
          _
        // Predicated region
        $region61: #{tpu_custom_call.1} parent=35 // pred_check
          %p635 = pneg %p202
        $region62: #{tpu_custom_call.1} parent=35 // pred_check_branch
          %637 = sbr.rel (%p635) target = $region64
        $region63: #{tpu_custom_call.1} parent=35 // pred_region
          %639 = vsyncadd [#allocation8], 0
          %s640 = smul.addr %s40, 4
          %s641 = scalar_lea.hbm %s6, %s640
          %s643 = sshll.u32 [#allocation12], 4
          %s644 = int_to_ptr.vmem [resolvable:$true] %s643
          %s645 = sshll.u32 %s641, 4
          %s646 = int_to_ptr.hbm [resolvable:$true] %s645
          %648 = dma.vmem_to_hbm [thread:$0]  %s644, 64, %s646, [#allocation8]
        $region64: #{tpu_custom_call.1} parent=35 // pred_fallthru
          _
        // Predicated region
        $region65: #{tpu_custom_call.1} parent=35 // pred_check
          %p649 = pneg %p202
        $region66: #{tpu_custom_call.1} parent=35 // pred_check_branch
          %651 = sbr.rel (%p649) target = $region68
        $region67: #{tpu_custom_call.1} parent=35 // pred_region
          %653 = dma.done [#allocation8], 64
        $region68: #{tpu_custom_call.1} parent=35 // pred_fallthru
          _
      $region36: #{tpu_custom_call.1} parent=5 // pred_fallthru
        _
      %p654 = scmp.le.s32.totalorder 2, %s30
      // Predicated region
      $region69: #{tpu_custom_call.1} parent=5 // pred_check
        %p655 = pneg %p654
      $region70: #{tpu_custom_call.1} parent=5 // pred_check_branch
        %657 = sbr.rel (%p655) target = $region72
      $region71: #{tpu_custom_call.1} parent=5 // pred_region
        %s658 = ssub.s32 %s30, 2
      $region72: #{tpu_custom_call.1} parent=5 // pred_fallthru
        _
    $region6: #{tpu_custom_call.1} parent=1 // loop_footer
      %s34 = sadd.s32 1, %s30
    $region7: #{tpu_custom_call.1} parent=1 // loop_footer_branch
      %29 = sbr.rel target = $region3
    $region8: #{tpu_custom_call.1} parent=1 // loop_exit
      _
    %659 = vsyncpa [#allocation7], 1
    %s660 = scalar_lea.sflag [#allocation7], 1
    %661 = vsyncpa %s660, 1
    %662 = vsyncpa [#allocation10], 1
    %s663 = scalar_lea.sflag [#allocation10], 1
    %664 = vsyncpa %s663, 1
    %665 = vsyncpa [#allocation8], 1
    %s666 = scalar_lea.sflag [#allocation8], 1
    %667 = vsyncpa %s666, 1

</llo_original>
